<compile_context>
chip_gen: v7x
topology: tpu7x:2x2x1
jax: 0.10.0
libtpu: 0.0.40
codegen_flags: <defaults>
</compile_context>

<pallas_src>
import jax
import jax.numpy as jnp
from jax.experimental import pallas as pl
from jax.experimental.pallas import tpu as pltpu


def layup_kernel(x_ref, we_ref, be_ref, w1_ref, b1_ref, w2_ref, b2_ref,
                 wr1_ref, wr2_ref, out_ref):
    """Fused LayUP forward on one batch tile.

    x_ref   : [TB, F_in]   flattened NCHW input tile (bf16)
    we/be   : [F_in, D]/[1, D]   patch/feature embedding (bf16 / f32)
    w1/b1   : [D, D]/[1, D]      backbone block 1 (hooked: 'block1')
    w2/b2   : [D, D]/[1, D]      backbone block 2 (hooked: 'block2')
    wr1/wr2 : [D, NC]            ridge head weight split (ridge_bias=False)
    out     : [TB, NC]           logits tile (f32)
    """
    bf16 = jnp.bfloat16
    x = x_ref[...]

    # embedding
    h0 = jnp.dot(x, we_ref[...], preferred_element_type=jnp.float32) + be_ref[...]
    # TODO(synk): jax.nn.gelu defaults to the tanh approximation; PyTorch
    # nn.GELU defaults to exact erf -> tiny drift vs a real PyTorch backbone.
    h0 = jax.nn.gelu(h0)

    # backbone block 1 (hook 'block1' captures h1)
    h1 = jnp.dot(h0.astype(bf16), w1_ref[...],
                 preferred_element_type=jnp.float32) + b1_ref[...]
    h1 = jax.nn.gelu(h1)
    h1_bf = h1.astype(bf16)          # hoisted: reused by block-2 and ridge matmuls

    # backbone block 2 (hook 'block2' captures h2)
    h2 = jnp.dot(h1_bf, w2_ref[...],
                 preferred_element_type=jnp.float32) + b2_ref[...]
    h2 = jax.nn.gelu(h2)
    h2_bf = h2.astype(bf16)

    # concat([h1, h2], dim=1) @ W_ridge  ==  h1 @ wr1 + h2 @ wr2
    out = jnp.dot(h1_bf, wr1_ref[...], preferred_element_type=jnp.float32)
    out = out + jnp.dot(h2_bf, wr2_ref[...], preferred_element_type=jnp.float32)
    out_ref[...] = out.astype(out_ref.dtype)


def _round_up(n, m):
    return ((n + m - 1) // m) * m


def _pad2d(a, rows, cols):
    pr, pc = rows - a.shape[0], cols - a.shape[1]
    if pr == 0 and pc == 0:
        return a
    return jnp.pad(a, ((0, pr), (0, pc)))


def prepare_params(params):
    """One-time pad/cast of all weights to MXU/lane-friendly shapes.

    Runs once at init (hoisted out of the per-call forward path) so each
    forward call's HBM traffic is just the input tiles and the logits.
    """
    we, be, w1, b1, w2, b2, wr = params
    f_in, d = we.shape
    nc = wr.shape[1]
    Fp = _round_up(f_in, 128)
    Dp = _round_up(d, 128)
    NCp = _round_up(nc, 128)
    bf16 = jnp.bfloat16
    prepared = {
        "we": _pad2d(we, Fp, Dp).astype(bf16),
        "be": _pad2d(be, 1, Dp).astype(jnp.float32),
        "w1": _pad2d(w1, Dp, Dp).astype(bf16),
        "b1": _pad2d(b1, 1, Dp).astype(jnp.float32),
        "w2": _pad2d(w2, Dp, Dp).astype(bf16),
        "b2": _pad2d(b2, 1, Dp).astype(jnp.float32),
        # ridge weight split in the wrapper (tile-aligned loads regardless of D)
        "wr1": _pad2d(wr[:d, :], Dp, NCp).astype(bf16),
        "wr2": _pad2d(wr[d:, :], Dp, NCp).astype(bf16),
        "dims": (f_in, d, nc, Fp, Dp, NCp),
    }
    return prepared


def layup_forward(x_nchw, prepared, *, tb=512):
    """Flatten + minimally pad the batch, run the fused kernel, slice back."""
    f_in, d, nc, Fp, Dp, NCp = prepared["dims"]
    B = x_nchw.shape[0]
    x_flat = x_nchw.reshape(B, -1)  # glue: NCHW -> [B, C*H*W]
    assert x_flat.shape[1] == f_in, (x_flat.shape, f_in)

    # Batch tiling: large tile for throughput, but never pad a small batch up
    # to a full tile -- only up to the next sublane multiple (8).
    B8 = _round_up(B, 8)
    tb_eff = min(_round_up(tb, 8), B8)
    n_steps = pl.cdiv(B8, tb_eff)      # >= 2 steps whenever B > tb (v7x: both TCs fed)
    Bp = n_steps * tb_eff

    xp = _pad2d(x_flat, Bp, Fp).astype(jnp.bfloat16)

    resident = lambda i: (0, 0)        # same block every grid step -> stays in VMEM
    # Single-buffer the resident operands: a second pipeline buffer for a block
    # that never changes is pure dead VMEM.
    res_spec = lambda shape: pl.BlockSpec(shape, resident,
                                          pipeline_mode=pl.Buffered(1))

    out_padded = pl.pallas_call(
        layup_kernel,
        out_shape=jax.ShapeDtypeStruct((Bp, NCp), jnp.float32),
        grid=(n_steps,),
        in_specs=[
            pl.BlockSpec((tb_eff, Fp), lambda i: (i, 0)),   # x: streamed per tile
            res_spec((Fp, Dp)),          # we
            res_spec((1, Dp)),           # be
            res_spec((Dp, Dp)),          # w1
            res_spec((1, Dp)),           # b1
            res_spec((Dp, Dp)),          # w2
            res_spec((1, Dp)),           # b2
            res_spec((Dp, NCp)),         # wr1
            res_spec((Dp, NCp)),         # wr2
        ],
        out_specs=pl.BlockSpec((tb_eff, NCp), lambda i: (i, 0)),
        compiler_params=pltpu.CompilerParams(
            dimension_semantics=("parallel",)),
    )(xp, prepared["we"], prepared["be"], prepared["w1"], prepared["b1"],
      prepared["w2"], prepared["b2"], prepared["wr1"], prepared["wr2"])

    return out_padded[:B, :nc]


def layup_reference(x_nchw, params):
    """Pure-JAX reference mirroring the PyTorch forward semantics
    (with the same bf16-operand / f32-accumulation mixed precision)."""
    we, be, w1, b1, w2, b2, wr = params
    bf16 = jnp.bfloat16
    x = x_nchw.reshape(x_nchw.shape[0], -1).astype(bf16)
    h0 = jax.nn.gelu(jnp.dot(x, we.astype(bf16),
                             preferred_element_type=jnp.float32) + be)
    h1 = jax.nn.gelu(jnp.dot(h0.astype(bf16), w1.astype(bf16),
                             preferred_element_type=jnp.float32) + b1)  # hook 'block1'
    h2 = jax.nn.gelu(jnp.dot(h1.astype(bf16), w2.astype(bf16),
                             preferred_element_type=jnp.float32) + b2)  # hook 'block2'
    feats = jnp.concatenate([h1, h2], axis=1)  # sorted intralayer names
    return jnp.dot(feats.astype(bf16), wr.astype(bf16),
                   preferred_element_type=jnp.float32)  # Ridge (fast, no bias)


def init_params(key, f_in, d, num_classes, n_layers=2):
    ks = jax.random.split(key, 4)
    we = jax.random.normal(ks[0], (f_in, d), jnp.float32) * (1.0 / jnp.sqrt(f_in))
    be = jnp.zeros((1, d), jnp.float32)
    w1 = jax.random.normal(ks[1], (d, d), jnp.float32) * (1.0 / jnp.sqrt(d))
    b1 = jnp.full((1, d), 0.01, jnp.float32)
    w2 = jax.random.normal(ks[2], (d, d), jnp.float32) * (1.0 / jnp.sqrt(d))
    b2 = jnp.full((1, d), -0.01, jnp.float32)
    # Ridge: in_features = num_features * len(intralayers) = n_layers * d
    wr = jax.random.normal(ks[3], (n_layers * d, num_classes), jnp.float32) * \
         (1.0 / jnp.sqrt(n_layers * d))
    # TODO(synk): real Ridge weights come from update_ridge() (closed-form ridge
    # regression over a dataloader); here they are a deterministic random init.
    return (we, be, w1, b1, w2, b2, wr)


if __name__ == "__main__":
    B, C, H, W = 2, 4, 16, 16          # input NCHW
    D = 32                             # backbone.num_features
    NUM_CLASSES = 10
    F_IN = C * H * W

    key = jax.random.PRNGKey(0)
    kx, kp = jax.random.split(key)
    x = jax.random.normal(kx, (B, C, H, W), jnp.float32)
    params = init_params(kp, F_IN, D, NUM_CLASSES, n_layers=2)
    prepared = prepare_params(params)   # one-time weight pad/cast (hoisted)

    out = jax.block_until_ready(layup_forward(x, prepared))
    ref = jax.block_until_ready(layup_reference(x, params))

    assert out.shape == (B, NUM_CLASSES), out.shape
    assert jnp.allclose(out, ref, atol=5e-3, rtol=5e-3), \
        f"max abs err {jnp.max(jnp.abs(out - ref))}"
    print("KERNEL_OK")
</pallas_src>

<mosaic_0001>
module attributes {stable_mosaic.version = 11 : i64} {
  func.func @layup_kernel(%arg0: i32, %arg1: memref<8x1024xbf16, #tpu.memory_space<vmem>>, %arg2: memref<1024x128xbf16, #tpu.memory_space<vmem>>, %arg3: memref<1x128xf32, #tpu.memory_space<vmem>>, %arg4: memref<128x128xbf16, #tpu.memory_space<vmem>>, %arg5: memref<1x128xf32, #tpu.memory_space<vmem>>, %arg6: memref<128x128xbf16, #tpu.memory_space<vmem>>, %arg7: memref<1x128xf32, #tpu.memory_space<vmem>>, %arg8: memref<128x128xbf16, #tpu.memory_space<vmem>>, %arg9: memref<128x128xbf16, #tpu.memory_space<vmem>>, %arg10: memref<8x128xf32, #tpu.memory_space<vmem>>) attributes {dimension_semantics = [#tpu.dimension_semantics<parallel>], iteration_bounds = array<i64: 1>, scalar_prefetch = 0 : i64, scratch_operands = 0 : i64, tpu.core_type = #tpu.core_type<tc>, window_params = [{transform_indices = @transform_0, window_bounds = array<i64: 8, 1024>}, {pipeline_mode = #tpu.pipeline_mode<synchronous>, transform_indices = @transform_1, window_bounds = array<i64: 1024, 128>}, {pipeline_mode = #tpu.pipeline_mode<synchronous>, transform_indices = @transform_2, window_bounds = array<i64: 1, 128>}, {pipeline_mode = #tpu.pipeline_mode<synchronous>, transform_indices = @transform_3, window_bounds = array<i64: 128, 128>}, {pipeline_mode = #tpu.pipeline_mode<synchronous>, transform_indices = @transform_4, window_bounds = array<i64: 1, 128>}, {pipeline_mode = #tpu.pipeline_mode<synchronous>, transform_indices = @transform_5, window_bounds = array<i64: 128, 128>}, {pipeline_mode = #tpu.pipeline_mode<synchronous>, transform_indices = @transform_6, window_bounds = array<i64: 1, 128>}, {pipeline_mode = #tpu.pipeline_mode<synchronous>, transform_indices = @transform_7, window_bounds = array<i64: 128, 128>}, {pipeline_mode = #tpu.pipeline_mode<synchronous>, transform_indices = @transform_8, window_bounds = array<i64: 128, 128>}, {transform_indices = @transform_9, window_bounds = array<i64: 8, 128>}]} {
    %c0 = arith.constant 0 : index
    %c0_0 = arith.constant 0 : index
    %0 = vector.load %arg1[%c0, %c0_0] : memref<8x1024xbf16, #tpu.memory_space<vmem>>, vector<8x1024xbf16>
    %c0_1 = arith.constant 0 : index
    %c0_2 = arith.constant 0 : index
    %1 = vector.load %arg2[%c0_1, %c0_2] : memref<1024x128xbf16, #tpu.memory_space<vmem>>, vector<1024x128xbf16>
    %cst = arith.constant dense<0.000000e+00> : vector<8x128xf32>
    %2 = tpu.matmul %0, %1, %cst {dimension_numbers = #tpu.dot_dimension_numbers<[1], [0], [0], [1], [0, 0, 1, 1], [], []>} : vector<8x1024xbf16>, vector<1024x128xbf16>, vector<8x128xf32> -> vector<8x128xf32>
    %c0_3 = arith.constant 0 : index
    %c0_4 = arith.constant 0 : index
    %3 = vector.load %arg3[%c0_3, %c0_4] : memref<1x128xf32, #tpu.memory_space<vmem>>, vector<1x128xf32>
    %4 = vector.broadcast %3 : vector<1x128xf32> to vector<8x128xf32>
    %5 = arith.addf %2, %4 : vector<8x128xf32>
    %6 = arith.mulf %5, %5 : vector<8x128xf32>
    %7 = arith.mulf %5, %6 : vector<8x128xf32>
    %cst_5 = arith.constant 4.471500e-02 : f32
    %8 = vector.broadcast %cst_5 : f32 to vector<8x128xf32>
    %9 = arith.mulf %8, %7 : vector<8x128xf32>
    %10 = arith.addf %5, %9 : vector<8x128xf32>
    %cst_6 = arith.constant 0.797884583 : f32
    %11 = vector.broadcast %cst_6 : f32 to vector<8x128xf32>
    %12 = arith.mulf %11, %10 : vector<8x128xf32>
    %13 = math.tanh %12 : vector<8x128xf32>
    %cst_7 = arith.constant 1.000000e+00 : f32
    %14 = vector.broadcast %cst_7 : f32 to vector<8x128xf32>
    %15 = arith.addf %14, %13 : vector<8x128xf32>
    %cst_8 = arith.constant 5.000000e-01 : f32
    %16 = vector.broadcast %cst_8 : f32 to vector<8x128xf32>
    %17 = arith.mulf %16, %15 : vector<8x128xf32>
    %18 = arith.mulf %5, %17 : vector<8x128xf32>
    %19 = arith.truncf %18 : vector<8x128xf32> to vector<8x128xbf16>
    %c0_9 = arith.constant 0 : index
    %c0_10 = arith.constant 0 : index
    %20 = vector.load %arg4[%c0_9, %c0_10] : memref<128x128xbf16, #tpu.memory_space<vmem>>, vector<128x128xbf16>
    %cst_11 = arith.constant dense<0.000000e+00> : vector<8x128xf32>
    %21 = tpu.matmul %19, %20, %cst_11 {dimension_numbers = #tpu.dot_dimension_numbers<[1], [0], [0], [1], [0, 0, 1, 1], [], []>} : vector<8x128xbf16>, vector<128x128xbf16>, vector<8x128xf32> -> vector<8x128xf32>
    %c0_12 = arith.constant 0 : index
    %c0_13 = arith.constant 0 : index
    %22 = vector.load %arg5[%c0_12, %c0_13] : memref<1x128xf32, #tpu.memory_space<vmem>>, vector<1x128xf32>
    %23 = vector.broadcast %22 : vector<1x128xf32> to vector<8x128xf32>
    %24 = arith.addf %21, %23 : vector<8x128xf32>
    %25 = arith.mulf %24, %24 : vector<8x128xf32>
    %26 = arith.mulf %24, %25 : vector<8x128xf32>
    %cst_14 = arith.constant 4.471500e-02 : f32
    %27 = vector.broadcast %cst_14 : f32 to vector<8x128xf32>
    %28 = arith.mulf %27, %26 : vector<8x128xf32>
    %29 = arith.addf %24, %28 : vector<8x128xf32>
    %cst_15 = arith.constant 0.797884583 : f32
    %30 = vector.broadcast %cst_15 : f32 to vector<8x128xf32>
    %31 = arith.mulf %30, %29 : vector<8x128xf32>
    %32 = math.tanh %31 : vector<8x128xf32>
    %cst_16 = arith.constant 1.000000e+00 : f32
    %33 = vector.broadcast %cst_16 : f32 to vector<8x128xf32>
    %34 = arith.addf %33, %32 : vector<8x128xf32>
    %cst_17 = arith.constant 5.000000e-01 : f32
    %35 = vector.broadcast %cst_17 : f32 to vector<8x128xf32>
    %36 = arith.mulf %35, %34 : vector<8x128xf32>
    %37 = arith.mulf %24, %36 : vector<8x128xf32>
    %38 = arith.truncf %37 : vector<8x128xf32> to vector<8x128xbf16>
    %c0_18 = arith.constant 0 : index
    %c0_19 = arith.constant 0 : index
    %39 = vector.load %arg6[%c0_18, %c0_19] : memref<128x128xbf16, #tpu.memory_space<vmem>>, vector<128x128xbf16>
    %cst_20 = arith.constant dense<0.000000e+00> : vector<8x128xf32>
    %40 = tpu.matmul %38, %39, %cst_20 {dimension_numbers = #tpu.dot_dimension_numbers<[1], [0], [0], [1], [0, 0, 1, 1], [], []>} : vector<8x128xbf16>, vector<128x128xbf16>, vector<8x128xf32> -> vector<8x128xf32>
    %c0_21 = arith.constant 0 : index
    %c0_22 = arith.constant 0 : index
    %41 = vector.load %arg7[%c0_21, %c0_22] : memref<1x128xf32, #tpu.memory_space<vmem>>, vector<1x128xf32>
    %42 = vector.broadcast %41 : vector<1x128xf32> to vector<8x128xf32>
    %43 = arith.addf %40, %42 : vector<8x128xf32>
    %44 = arith.mulf %43, %43 : vector<8x128xf32>
    %45 = arith.mulf %43, %44 : vector<8x128xf32>
    %cst_23 = arith.constant 4.471500e-02 : f32
    %46 = vector.broadcast %cst_23 : f32 to vector<8x128xf32>
    %47 = arith.mulf %46, %45 : vector<8x128xf32>
    %48 = arith.addf %43, %47 : vector<8x128xf32>
    %cst_24 = arith.constant 0.797884583 : f32
    %49 = vector.broadcast %cst_24 : f32 to vector<8x128xf32>
    %50 = arith.mulf %49, %48 : vector<8x128xf32>
    %51 = math.tanh %50 : vector<8x128xf32>
    %cst_25 = arith.constant 1.000000e+00 : f32
    %52 = vector.broadcast %cst_25 : f32 to vector<8x128xf32>
    %53 = arith.addf %52, %51 : vector<8x128xf32>
    %cst_26 = arith.constant 5.000000e-01 : f32
    %54 = vector.broadcast %cst_26 : f32 to vector<8x128xf32>
    %55 = arith.mulf %54, %53 : vector<8x128xf32>
    %56 = arith.mulf %43, %55 : vector<8x128xf32>
    %57 = arith.truncf %56 : vector<8x128xf32> to vector<8x128xbf16>
    %c0_27 = arith.constant 0 : index
    %c0_28 = arith.constant 0 : index
    %58 = vector.load %arg8[%c0_27, %c0_28] : memref<128x128xbf16, #tpu.memory_space<vmem>>, vector<128x128xbf16>
    %cst_29 = arith.constant dense<0.000000e+00> : vector<8x128xf32>
    %59 = tpu.matmul %38, %58, %cst_29 {dimension_numbers = #tpu.dot_dimension_numbers<[1], [0], [0], [1], [0, 0, 1, 1], [], []>} : vector<8x128xbf16>, vector<128x128xbf16>, vector<8x128xf32> -> vector<8x128xf32>
    %c0_30 = arith.constant 0 : index
    %c0_31 = arith.constant 0 : index
    %60 = vector.load %arg9[%c0_30, %c0_31] : memref<128x128xbf16, #tpu.memory_space<vmem>>, vector<128x128xbf16>
    %cst_32 = arith.constant dense<0.000000e+00> : vector<8x128xf32>
    %61 = tpu.matmul %57, %60, %cst_32 {dimension_numbers = #tpu.dot_dimension_numbers<[1], [0], [0], [1], [0, 0, 1, 1], [], []>} : vector<8x128xbf16>, vector<128x128xbf16>, vector<8x128xf32> -> vector<8x128xf32>
    %62 = arith.addf %59, %61 : vector<8x128xf32>
    %c0_33 = arith.constant 0 : index
    %c0_34 = arith.constant 0 : index
    %63 = vector.load %arg10[%c0_33, %c0_34] : memref<8x128xf32, #tpu.memory_space<vmem>>, vector<8x128xf32>
    tpu.vector_store %arg10[%c0_33, %c0_34], %62 {strides = array<i32>} : memref<8x128xf32, #tpu.memory_space<vmem>>, vector<8x128xf32>,
    return
  }
  func.func @transform_0(%arg0: i32) -> (i32, i32) {
    %c0_i32 = arith.constant 0 : i32
    %c0_i32_0 = arith.constant 0 : i32
    return %arg0, %c0_i32 : i32, i32
  }
  func.func @transform_1(%arg0: i32) -> (i32, i32) {
    %c0_i32 = arith.constant 0 : i32
    %c0_i32_0 = arith.constant 0 : i32
    %c0_i32_1 = arith.constant 0 : i32
    return %c0_i32, %c0_i32_0 : i32, i32
  }
  func.func @transform_2(%arg0: i32) -> (i32, i32) {
    %c0_i32 = arith.constant 0 : i32
    %c0_i32_0 = arith.constant 0 : i32
    %c0_i32_1 = arith.constant 0 : i32
    return %c0_i32, %c0_i32_0 : i32, i32
  }
  func.func @transform_3(%arg0: i32) -> (i32, i32) {
    %c0_i32 = arith.constant 0 : i32
    %c0_i32_0 = arith.constant 0 : i32
    %c0_i32_1 = arith.constant 0 : i32
    return %c0_i32, %c0_i32_0 : i32, i32
  }
  func.func @transform_4(%arg0: i32) -> (i32, i32) {
    %c0_i32 = arith.constant 0 : i32
    %c0_i32_0 = arith.constant 0 : i32
    %c0_i32_1 = arith.constant 0 : i32
    return %c0_i32, %c0_i32_0 : i32, i32
  }
  func.func @transform_5(%arg0: i32) -> (i32, i32) {
    %c0_i32 = arith.constant 0 : i32
    %c0_i32_0 = arith.constant 0 : i32
    %c0_i32_1 = arith.constant 0 : i32
    return %c0_i32, %c0_i32_0 : i32, i32
  }
  func.func @transform_6(%arg0: i32) -> (i32, i32) {
    %c0_i32 = arith.constant 0 : i32
    %c0_i32_0 = arith.constant 0 : i32
    %c0_i32_1 = arith.constant 0 : i32
    return %c0_i32, %c0_i32_0 : i32, i32
  }
  func.func @transform_7(%arg0: i32) -> (i32, i32) {
    %c0_i32 = arith.constant 0 : i32
    %c0_i32_0 = arith.constant 0 : i32
    %c0_i32_1 = arith.constant 0 : i32
    return %c0_i32, %c0_i32_0 : i32, i32
  }
  func.func @transform_8(%arg0: i32) -> (i32, i32) {
    %c0_i32 = arith.constant 0 : i32
    %c0_i32_0 = arith.constant 0 : i32
    %c0_i32_1 = arith.constant 0 : i32
    return %c0_i32, %c0_i32_0 : i32, i32
  }
  func.func @transform_9(%arg0: i32) -> (i32, i32) {
    %c0_i32 = arith.constant 0 : i32
    %c0_i32_0 = arith.constant 0 : i32
    return %arg0, %c0_i32 : i32, i32
  }
}

</mosaic_0001>

<llo_original>
// kernel: tpu_custom_call.1
$region0: #{tpu_custom_call.1}
  #allocation0 [shape = 'u32[]', space=smem, size = 0x4, offset = 0x4, fixed_abs, tag = 'smem constant byte address 0x4 - core index']
  #allocation1 [shape = 'u32[144,128]{1,0:T(1,128)}', space=vmem, size = 0x12000, scoped, tag = 'internal scratch']
  %s0 = inlined_call_operand.hbm [shape: bf16[8,1024], index: 0, kind: input, shape index: {}]
  %s1 = inlined_call_operand.hbm [shape: bf16[1024,128], index: 1, kind: input, shape index: {}]
  %s2 = inlined_call_operand.vmem [shape: f32[1,128], index: 2, kind: input, shape index: {}]
  %s3 = inlined_call_operand.hbm [shape: bf16[128,128], index: 3, kind: input, shape index: {}]
  %s4 = inlined_call_operand.vmem [shape: f32[1,128], index: 4, kind: input, shape index: {}]
  %s5 = inlined_call_operand.hbm [shape: bf16[128,128], index: 5, kind: input, shape index: {}]
  %s6 = inlined_call_operand.vmem [shape: f32[1,128], index: 6, kind: input, shape index: {}]
  %s7 = inlined_call_operand.hbm [shape: bf16[128,128], index: 7, kind: input, shape index: {}]
  %s8 = inlined_call_operand.hbm [shape: bf16[128,128], index: 8, kind: input, shape index: {}]
  %s9 = inlined_call_operand.hbm [shape: f32[8,128], index: 9, kind: output, shape index: {}]
  %s10 = sld [smem:[#allocation0]]
  $region70: #{tpu_custom_call.1} parent=0
    _
  %s12 = ssub.s32 1, %s10
  %s13 = scalar_select 0, %s12, %s10
  $region1: #{tpu_custom_call.1} parent=0
    #allocation2 [shape = 'u8[16384]{0}', space=vmem, size = 0x4000, scoped, tag = 'input window, operand 0, single buffered']
    #allocation3 [shape = 's32[1]{0}', space=sflag, size = 0x4, scoped, tag = 'scoped memory for tpu_custom_call.1']
    #allocation4 [shape = 's32[1]{0}', space=sflag, size = 0x4, scoped, tag = 'scoped memory for tpu_custom_call.1']
    #allocation5 [shape = 'u8[262144]{0}', space=vmem, size = 0x40000, scoped, tag = 'input window, operand 1, single buffered']
    #allocation6 [shape = 's32[1]{0}', space=sflag, size = 0x4, scoped, tag = 'scoped memory for tpu_custom_call.1']
    #allocation7 [shape = 'u8[32768]{0}', space=vmem, size = 0x8000, scoped, tag = 'input window, operand 3, single buffered']
    #allocation8 [shape = 'u8[32768]{0}', space=vmem, size = 0x8000, scoped, tag = 'input window, operand 5, single buffered']
    #allocation9 [shape = 's32[1]{0}', space=sflag, size = 0x4, scoped, tag = 'scoped memory for tpu_custom_call.1']
    #allocation10 [shape = 'u8[32768]{0}', space=vmem, size = 0x8000, scoped, tag = 'input window, operand 7, single buffered']
    #allocation11 [shape = 'u8[32768]{0}', space=vmem, size = 0x8000, scoped, tag = 'input window, operand 8, single buffered']
    #allocation12 [shape = 's32[1]{0}', space=sflag, size = 0x4, scoped, tag = 'scoped memory for tpu_custom_call.1']
    #allocation13 [shape = 'u8[4096]{0}', space=vmem, size = 0x1000, scoped, tag = 'output window, operand 0, single buffered']
    %14 = vsyncpa [#allocation3], 0
    %15 = vsyncpa [#allocation6], 0
    %16 = vsyncpa [#allocation9], 0
    %17 = vsyncpa [#allocation12], 0
    %18 = vsyncpa [#allocation4], 0
    // Predicated region
    $region2: #{tpu_custom_call.1} parent=1 // pred_check
      _
    $region3: #{tpu_custom_call.1} parent=1 // pred_check_branch
      %20 = sbr.rel (0) target = $region5
    $region4: #{tpu_custom_call.1} parent=1 // pred_region
      %s22 = ssub.s32 512, 512
      %23 = vsyncadd [#allocation3], %s22
      %s25 = sshll.u32 [#allocation2], 4
      %s26 = int_to_ptr.vmem [resolvable:$true] %s25
      %28 = dma.hbm_to_vmem [thread:$0]  %s0, 512, %s26, [#allocation3]
    $region5: #{tpu_custom_call.1} parent=1 // pred_fallthru
      _
    // Predicated region
    $region6: #{tpu_custom_call.1} parent=1 // pred_check
      _
    $region7: #{tpu_custom_call.1} parent=1 // pred_check_branch
      %30 = sbr.rel (0) target = $region9
    $region8: #{tpu_custom_call.1} parent=1 // pred_region
      %s32 = ssub.s32 8192, 8192
      %33 = vsyncadd [#allocation6], %s32
      %s34 = sshll.u32 [#allocation5], 4
      %s35 = int_to_ptr.vmem [resolvable:$true] %s34
      %40 = dma.hbm_to_vmem [thread:$0]  %s1, 8192, %s35, [#allocation6], 64, 64, 4
    $region9: #{tpu_custom_call.1} parent=1 // pred_fallthru
      _
    // Predicated region
    $region10: #{tpu_custom_call.1} parent=1 // pred_check
      _
    $region11: #{tpu_custom_call.1} parent=1 // pred_check_branch
      %42 = sbr.rel (0) target = $region13
    $region12: #{tpu_custom_call.1} parent=1 // pred_region
      _
    $region13: #{tpu_custom_call.1} parent=1 // pred_fallthru
      _
    // Predicated region
    $region14: #{tpu_custom_call.1} parent=1 // pred_check
      _
    $region15: #{tpu_custom_call.1} parent=1 // pred_check_branch
      %44 = sbr.rel (0) target = $region17
    $region16: #{tpu_custom_call.1} parent=1 // pred_region
      %s46 = ssub.s32 1024, 1024
      %47 = vsyncadd [#allocation6], %s46
      %s48 = sshll.u32 [#allocation7], 4
      %s49 = int_to_ptr.vmem [resolvable:$true] %s48
      %54 = dma.hbm_to_vmem [thread:$0]  %s3, 1024, %s49, [#allocation6], 64, 64, 4
    $region17: #{tpu_custom_call.1} parent=1 // pred_fallthru
      _
    // Predicated region
    $region18: #{tpu_custom_call.1} parent=1 // pred_check
      _
    $region19: #{tpu_custom_call.1} parent=1 // pred_check_branch
      %56 = sbr.rel (0) target = $region21
    $region20: #{tpu_custom_call.1} parent=1 // pred_region
      _
    $region21: #{tpu_custom_call.1} parent=1 // pred_fallthru
      _
    // Predicated region
    $region22: #{tpu_custom_call.1} parent=1 // pred_check
      _
    $region23: #{tpu_custom_call.1} parent=1 // pred_check_branch
      %58 = sbr.rel (0) target = $region25
    $region24: #{tpu_custom_call.1} parent=1 // pred_region
      %s60 = ssub.s32 1024, 1024
      %61 = vsyncadd [#allocation9], %s60
      %s62 = sshll.u32 [#allocation8], 4
      %s63 = int_to_ptr.vmem [resolvable:$true] %s62
      %68 = dma.hbm_to_vmem [thread:$0]  %s5, 1024, %s63, [#allocation9], 64, 64, 4
    $region25: #{tpu_custom_call.1} parent=1 // pred_fallthru
      _
    // Predicated region
    $region26: #{tpu_custom_call.1} parent=1 // pred_check
      _
    $region27: #{tpu_custom_call.1} parent=1 // pred_check_branch
      %70 = sbr.rel (0) target = $region29
    $region28: #{tpu_custom_call.1} parent=1 // pred_region
      _
    $region29: #{tpu_custom_call.1} parent=1 // pred_fallthru
      _
    // Predicated region
    $region30: #{tpu_custom_call.1} parent=1 // pred_check
      _
    $region31: #{tpu_custom_call.1} parent=1 // pred_check_branch
      %72 = sbr.rel (0) target = $region33
    $region32: #{tpu_custom_call.1} parent=1 // pred_region
      %s74 = ssub.s32 1024, 1024
      %75 = vsyncadd [#allocation9], %s74
      %s76 = sshll.u32 [#allocation10], 4
      %s77 = int_to_ptr.vmem [resolvable:$true] %s76
      %82 = dma.hbm_to_vmem [thread:$0]  %s7, 1024, %s77, [#allocation9], 64, 64, 4
    $region33: #{tpu_custom_call.1} parent=1 // pred_fallthru
      _
    // Predicated region
    $region34: #{tpu_custom_call.1} parent=1 // pred_check
      _
    $region35: #{tpu_custom_call.1} parent=1 // pred_check_branch
      %84 = sbr.rel (0) target = $region37
    $region36: #{tpu_custom_call.1} parent=1 // pred_region
      %s86 = ssub.s32 1024, 1024
      %87 = vsyncadd [#allocation12], %s86
      %s88 = sshll.u32 [#allocation11], 4
      %s89 = int_to_ptr.vmem [resolvable:$true] %s88
      %94 = dma.hbm_to_vmem [thread:$0]  %s8, 1024, %s89, [#allocation12], 64, 64, 4
    $region37: #{tpu_custom_call.1} parent=1 // pred_fallthru
      _
    // Predicated region
    $region38: #{tpu_custom_call.1} parent=1 // pred_check
      _
    $region39: #{tpu_custom_call.1} parent=1 // pred_check_branch
      %96 = sbr.rel (0) target = $region41
    $region40: #{tpu_custom_call.1} parent=1 // pred_region
      %97 = dma.done [#allocation3], 512
    $region41: #{tpu_custom_call.1} parent=1 // pred_fallthru
      _
    // Predicated region
    $region42: #{tpu_custom_call.1} parent=1 // pred_check
      _
    $region43: #{tpu_custom_call.1} parent=1 // pred_check_branch
      %99 = sbr.rel (0) target = $region45
    $region44: #{tpu_custom_call.1} parent=1 // pred_region
      %100 = dma.done [#allocation6], 8192
    $region45: #{tpu_custom_call.1} parent=1 // pred_fallthru
      _
    // Predicated region
    $region46: #{tpu_custom_call.1} parent=1 // pred_check
      _
    $region47: #{tpu_custom_call.1} parent=1 // pred_check_branch
      %102 = sbr.rel (0) target = $region49
    $region48: #{tpu_custom_call.1} parent=1 // pred_region
      %103 = dma.done [#allocation6], 1024
    $region49: #{tpu_custom_call.1} parent=1 // pred_fallthru
      _
    // Predicated region
    $region50: #{tpu_custom_call.1} parent=1 // pred_check
      _
    $region51: #{tpu_custom_call.1} parent=1 // pred_check_branch
      %105 = sbr.rel (0) target = $region53
    $region52: #{tpu_custom_call.1} parent=1 // pred_region
      %106 = dma.done [#allocation9], 1024
    $region53: #{tpu_custom_call.1} parent=1 // pred_fallthru
      _
    // Predicated region
    $region54: #{tpu_custom_call.1} parent=1 // pred_check
      _
    $region55: #{tpu_custom_call.1} parent=1 // pred_check_branch
      %108 = sbr.rel (0) target = $region57
    $region56: #{tpu_custom_call.1} parent=1 // pred_region
      %109 = dma.done [#allocation9], 1024
    $region57: #{tpu_custom_call.1} parent=1 // pred_fallthru
      _
    // Predicated region
    $region58: #{tpu_custom_call.1} parent=1 // pred_check
      _
    $region59: #{tpu_custom_call.1} parent=1 // pred_check_branch
      %111 = sbr.rel (0) target = $region61
    $region60: #{tpu_custom_call.1} parent=1 // pred_region
      %112 = dma.done [#allocation12], 1024
    $region61: #{tpu_custom_call.1} parent=1 // pred_fallthru
      _
    %v114 = vld [vmem:[#allocation2] sm:$0xff]
    %v115 = vld [vmem:[#allocation2 + $0x8] sm:$0xff]
    %v116 = vld [vmem:[#allocation2 + $0x10] sm:$0xff]
    %v117 = vld [vmem:[#allocation2 + $0x18] sm:$0xff]
    %v118 = vld [vmem:[#allocation5] sm:$0xf]
    %v119 = vld [vmem:[#allocation5 + $0x4] sm:$0xf]
    %v120 = vld [vmem:[#allocation5 + $0x8] sm:$0xf]
    %v121 = vld [vmem:[#allocation5 + $0xc] sm:$0xf]
    %v122 = vld [vmem:[#allocation5 + $0x10] sm:$0xf]
    %v123 = vld [vmem:[#allocation5 + $0x14] sm:$0xf]
    %v124 = vld [vmem:[#allocation5 + $0x18] sm:$0xf]
    %v125 = vld [vmem:[#allocation5 + $0x1c] sm:$0xf]
    %v126 = vld [vmem:[#allocation5 + $0x20] sm:$0xf]
    %v127 = vld [vmem:[#allocation5 + $0x24] sm:$0xf]
    %v128 = vld [vmem:[#allocation5 + $0x28] sm:$0xf]
    %v129 = vld [vmem:[#allocation5 + $0x2c] sm:$0xf]
    %v130 = vld [vmem:[#allocation5 + $0x30] sm:$0xf]
    %v131 = vld [vmem:[#allocation5 + $0x34] sm:$0xf]
    %v132 = vld [vmem:[#allocation5 + $0x38] sm:$0xf]
    %v133 = vld [vmem:[#allocation5 + $0x3c] sm:$0xf]
    %v134 = vld [vmem:[#allocation5 + $0x40] sm:$0xf]
    %v135 = vld [vmem:[#allocation5 + $0x44] sm:$0xf]
    %v136 = vld [vmem:[#allocation5 + $0x48] sm:$0xf]
    %v137 = vld [vmem:[#allocation5 + $0x4c] sm:$0xf]
    %v138 = vld [vmem:[#allocation5 + $0x50] sm:$0xf]
    %v139 = vld [vmem:[#allocation5 + $0x54] sm:$0xf]
    %v140 = vld [vmem:[#allocation5 + $0x58] sm:$0xf]
    %v141 = vld [vmem:[#allocation5 + $0x5c] sm:$0xf]
    %v142 = vld [vmem:[#allocation5 + $0x60] sm:$0xf]
    %v143 = vld [vmem:[#allocation5 + $0x64] sm:$0xf]
    %v144 = vld [vmem:[#allocation5 + $0x68] sm:$0xf]
    %v145 = vld [vmem:[#allocation5 + $0x6c] sm:$0xf]
    %v146 = vld [vmem:[#allocation5 + $0x70] sm:$0xf]
    %v147 = vld [vmem:[#allocation5 + $0x74] sm:$0xf]
    %v148 = vld [vmem:[#allocation5 + $0x78] sm:$0xf]
    %v149 = vld [vmem:[#allocation5 + $0x7c] sm:$0xf]
    %v150 = vld [vmem:[#allocation5 + $0x80] sm:$0xf]
    %v151 = vld [vmem:[#allocation5 + $0x84] sm:$0xf]
    %v152 = vld [vmem:[#allocation5 + $0x88] sm:$0xf]
    %v153 = vld [vmem:[#allocation5 + $0x8c] sm:$0xf]
    %v154 = vld [vmem:[#allocation5 + $0x90] sm:$0xf]
    %v155 = vld [vmem:[#allocation5 + $0x94] sm:$0xf]
    %v156 = vld [vmem:[#allocation5 + $0x98] sm:$0xf]
    %v157 = vld [vmem:[#allocation5 + $0x9c] sm:$0xf]
    %v158 = vld [vmem:[#allocation5 + $0xa0] sm:$0xf]
    %v159 = vld [vmem:[#allocation5 + $0xa4] sm:$0xf]
    %v160 = vld [vmem:[#allocation5 + $0xa8] sm:$0xf]
    %v161 = vld [vmem:[#allocation5 + $0xac] sm:$0xf]
    %v162 = vld [vmem:[#allocation5 + $0xb0] sm:$0xf]
    %v163 = vld [vmem:[#allocation5 + $0xb4] sm:$0xf]
    %v164 = vld [vmem:[#allocation5 + $0xb8] sm:$0xf]
    %v165 = vld [vmem:[#allocation5 + $0xbc] sm:$0xf]
    %v166 = vld [vmem:[#allocation5 + $0xc0] sm:$0xf]
    %v167 = vld [vmem:[#allocation5 + $0xc4] sm:$0xf]
    %v168 = vld [vmem:[#allocation5 + $0xc8] sm:$0xf]
    %v169 = vld [vmem:[#allocation5 + $0xcc] sm:$0xf]
    %v170 = vld [vmem:[#allocation5 + $0xd0] sm:$0xf]
    %v171 = vld [vmem:[#allocation5 + $0xd4] sm:$0xf]
    %v172 = vld [vmem:[#allocation5 + $0xd8] sm:$0xf]
    %v173 = vld [vmem:[#allocation5 + $0xdc] sm:$0xf]
    %v174 = vld [vmem:[#allocation5 + $0xe0] sm:$0xf]
    %v175 = vld [vmem:[#allocation5 + $0xe4] sm:$0xf]
    %v176 = vld [vmem:[#allocation5 + $0xe8] sm:$0xf]
    %v177 = vld [vmem:[#allocation5 + $0xec] sm:$0xf]
    %v178 = vld [vmem:[#allocation5 + $0xf0] sm:$0xf]
    %v179 = vld [vmem:[#allocation5 + $0xf4] sm:$0xf]
    %v180 = vld [vmem:[#allocation5 + $0xf8] sm:$0xf]
    %v181 = vld [vmem:[#allocation5 + $0xfc] sm:$0xf]
    %v182 = vld [vmem:[#allocation5 + $0x100] sm:$0xf]
    %v183 = vld [vmem:[#allocation5 + $0x104] sm:$0xf]
    %v184 = vld [vmem:[#allocation5 + $0x108] sm:$0xf]
    %v185 = vld [vmem:[#allocation5 + $0x10c] sm:$0xf]
    %v186 = vld [vmem:[#allocation5 + $0x110] sm:$0xf]
    %v187 = vld [vmem:[#allocation5 + $0x114] sm:$0xf]
    %v188 = vld [vmem:[#allocation5 + $0x118] sm:$0xf]
    %v189 = vld [vmem:[#allocation5 + $0x11c] sm:$0xf]
    %v190 = vld [vmem:[#allocation5 + $0x120] sm:$0xf]
    %v191 = vld [vmem:[#allocation5 + $0x124] sm:$0xf]
    %v192 = vld [vmem:[#allocation5 + $0x128] sm:$0xf]
    %v193 = vld [vmem:[#allocation5 + $0x12c] sm:$0xf]
    %v194 = vld [vmem:[#allocation5 + $0x130] sm:$0xf]
    %v195 = vld [vmem:[#allocation5 + $0x134] sm:$0xf]
    %v196 = vld [vmem:[#allocation5 + $0x138] sm:$0xf]
    %v197 = vld [vmem:[#allocation5 + $0x13c] sm:$0xf]
    %v198 = vld [vmem:[#allocation5 + $0x140] sm:$0xf]
    %v199 = vld [vmem:[#allocation5 + $0x144] sm:$0xf]
    %v200 = vld [vmem:[#allocation5 + $0x148] sm:$0xf]
    %v201 = vld [vmem:[#allocation5 + $0x14c] sm:$0xf]
    %v202 = vld [vmem:[#allocation5 + $0x150] sm:$0xf]
    %v203 = vld [vmem:[#allocation5 + $0x154] sm:$0xf]
    %v204 = vld [vmem:[#allocation5 + $0x158] sm:$0xf]
    %v205 = vld [vmem:[#allocation5 + $0x15c] sm:$0xf]
    %v206 = vld [vmem:[#allocation5 + $0x160] sm:$0xf]
    %v207 = vld [vmem:[#allocation5 + $0x164] sm:$0xf]
    %v208 = vld [vmem:[#allocation5 + $0x168] sm:$0xf]
    %v209 = vld [vmem:[#allocation5 + $0x16c] sm:$0xf]
    %v210 = vld [vmem:[#allocation5 + $0x170] sm:$0xf]
    %v211 = vld [vmem:[#allocation5 + $0x174] sm:$0xf]
    %v212 = vld [vmem:[#allocation5 + $0x178] sm:$0xf]
    %v213 = vld [vmem:[#allocation5 + $0x17c] sm:$0xf]
    %v214 = vld [vmem:[#allocation5 + $0x180] sm:$0xf]
    %v215 = vld [vmem:[#allocation5 + $0x184] sm:$0xf]
    %v216 = vld [vmem:[#allocation5 + $0x188] sm:$0xf]
    %v217 = vld [vmem:[#allocation5 + $0x18c] sm:$0xf]
    %v218 = vld [vmem:[#allocation5 + $0x190] sm:$0xf]
    %v219 = vld [vmem:[#allocation5 + $0x194] sm:$0xf]
    %v220 = vld [vmem:[#allocation5 + $0x198] sm:$0xf]
    %v221 = vld [vmem:[#allocation5 + $0x19c] sm:$0xf]
    %v222 = vld [vmem:[#allocation5 + $0x1a0] sm:$0xf]
    %v223 = vld [vmem:[#allocation5 + $0x1a4] sm:$0xf]
    %v224 = vld [vmem:[#allocation5 + $0x1a8] sm:$0xf]
    %v225 = vld [vmem:[#allocation5 + $0x1ac] sm:$0xf]
    %v226 = vld [vmem:[#allocation5 + $0x1b0] sm:$0xf]
    %v227 = vld [vmem:[#allocation5 + $0x1b4] sm:$0xf]
    %v228 = vld [vmem:[#allocation5 + $0x1b8] sm:$0xf]
    %v229 = vld [vmem:[#allocation5 + $0x1bc] sm:$0xf]
    %v230 = vld [vmem:[#allocation5 + $0x1c0] sm:$0xf]
    %v231 = vld [vmem:[#allocation5 + $0x1c4] sm:$0xf]
    %v232 = vld [vmem:[#allocation5 + $0x1c8] sm:$0xf]
    %v233 = vld [vmem:[#allocation5 + $0x1cc] sm:$0xf]
    %v234 = vld [vmem:[#allocation5 + $0x1d0] sm:$0xf]
    %v235 = vld [vmem:[#allocation5 + $0x1d4] sm:$0xf]
    %v236 = vld [vmem:[#allocation5 + $0x1d8] sm:$0xf]
    %v237 = vld [vmem:[#allocation5 + $0x1dc] sm:$0xf]
    %v238 = vld [vmem:[#allocation5 + $0x1e0] sm:$0xf]
    %v239 = vld [vmem:[#allocation5 + $0x1e4] sm:$0xf]
    %v240 = vld [vmem:[#allocation5 + $0x1e8] sm:$0xf]
    %v241 = vld [vmem:[#allocation5 + $0x1ec] sm:$0xf]
    %v242 = vld [vmem:[#allocation5 + $0x1f0] sm:$0xf]
    %v243 = vld [vmem:[#allocation5 + $0x1f4] sm:$0xf]
    %v244 = vld [vmem:[#allocation5 + $0x1f8] sm:$0xf]
    %v245 = vld [vmem:[#allocation5 + $0x1fc] sm:$0xf]
    %v246 = vld [vmem:[%s2] sm:$0x1]
    %v248 = vlaneseq
    %v249 = vshrl.u32 %v248, 7
    %v250 = vsub.s32 0, %v249
    %v251 = vrot.slane %v246, %v250
    %v257 = vunpack.c.l.b16 %v114
    %v258 = vunpack.c.h.b16 %v114
    %v259 = vunpack.c.l.b16 %v115
    %v260 = vunpack.c.h.b16 %v115
    %v261 = vunpack.c.l.b16 %v116
    %v262 = vunpack.c.h.b16 %v116
    %v263 = vunpack.c.l.b16 %v117
    %v264 = vunpack.c.h.b16 %v117
    %v265 = vpack.c.b16 %v257, %v257
    %v266 = vpack.c.b16 %v258, %v258
    %v267 = vpack.c.b16 %v259, %v259
    %v268 = vpack.c.b16 %v260, %v260
    %v269 = vpack.c.b16 %v261, %v261
    %v270 = vpack.c.b16 %v262, %v262
    %v271 = vpack.c.b16 %v263, %v263
    %v272 = vpack.c.b16 %v264, %v264
    %v409 = vunpack.c.l.b16 %v118
    %v410 = vunpack.c.l.b16 %v119
    %v411 = vunpack.c.l.b16 %v120
    %v412 = vunpack.c.l.b16 %v121
    %v413 = vunpack.c.l.b16 %v122
    %v414 = vunpack.c.l.b16 %v123
    %v415 = vunpack.c.l.b16 %v124
    %v416 = vunpack.c.l.b16 %v125
    %v417 = vunpack.c.l.b16 %v126
    %v418 = vunpack.c.l.b16 %v127
    %v419 = vunpack.c.l.b16 %v128
    %v420 = vunpack.c.l.b16 %v129
    %v421 = vunpack.c.l.b16 %v130
    %v422 = vunpack.c.l.b16 %v131
    %v423 = vunpack.c.l.b16 %v132
    %v424 = vunpack.c.l.b16 %v133
    %v425 = vunpack.c.l.b16 %v134
    %v426 = vunpack.c.l.b16 %v135
    %v427 = vunpack.c.l.b16 %v136
    %v428 = vunpack.c.l.b16 %v137
    %v429 = vunpack.c.l.b16 %v138
    %v430 = vunpack.c.l.b16 %v139
    %v431 = vunpack.c.l.b16 %v140
    %v432 = vunpack.c.l.b16 %v141
    %v433 = vunpack.c.l.b16 %v142
    %v434 = vunpack.c.l.b16 %v143
    %v435 = vunpack.c.l.b16 %v144
    %v436 = vunpack.c.l.b16 %v145
    %v437 = vunpack.c.l.b16 %v146
    %v438 = vunpack.c.l.b16 %v147
    %v439 = vunpack.c.l.b16 %v148
    %v440 = vunpack.c.l.b16 %v149
    %v441 = vunpack.c.l.b16 %v150
    %v442 = vunpack.c.l.b16 %v151
    %v443 = vunpack.c.l.b16 %v152
    %v444 = vunpack.c.l.b16 %v153
    %v445 = vunpack.c.l.b16 %v154
    %v446 = vunpack.c.l.b16 %v155
    %v447 = vunpack.c.l.b16 %v156
    %v448 = vunpack.c.l.b16 %v157
    %v449 = vunpack.c.l.b16 %v158
    %v450 = vunpack.c.l.b16 %v159
    %v451 = vunpack.c.l.b16 %v160
    %v452 = vunpack.c.l.b16 %v161
    %v453 = vunpack.c.l.b16 %v162
    %v454 = vunpack.c.l.b16 %v163
    %v455 = vunpack.c.l.b16 %v164
    %v456 = vunpack.c.l.b16 %v165
    %v457 = vunpack.c.l.b16 %v166
    %v458 = vunpack.c.l.b16 %v167
    %v459 = vunpack.c.l.b16 %v168
    %v460 = vunpack.c.l.b16 %v169
    %v461 = vunpack.c.l.b16 %v170
    %v462 = vunpack.c.l.b16 %v171
    %v463 = vunpack.c.l.b16 %v172
    %v464 = vunpack.c.l.b16 %v173
    %v465 = vunpack.c.l.b16 %v174
    %v466 = vunpack.c.l.b16 %v175
    %v467 = vunpack.c.l.b16 %v176
    %v468 = vunpack.c.l.b16 %v177
    %v469 = vunpack.c.l.b16 %v178
    %v470 = vunpack.c.l.b16 %v179
    %v471 = vunpack.c.l.b16 %v180
    %v472 = vunpack.c.l.b16 %v181
    %v473 = vunpack.c.l.b16 %v182
    %v474 = vunpack.c.l.b16 %v183
    %v475 = vunpack.c.l.b16 %v184
    %v476 = vunpack.c.l.b16 %v185
    %v477 = vunpack.c.l.b16 %v186
    %v478 = vunpack.c.l.b16 %v187
    %v479 = vunpack.c.l.b16 %v188
    %v480 = vunpack.c.l.b16 %v189
    %v481 = vunpack.c.l.b16 %v190
    %v482 = vunpack.c.l.b16 %v191
    %v483 = vunpack.c.l.b16 %v192
    %v484 = vunpack.c.l.b16 %v193
    %v485 = vunpack.c.l.b16 %v194
    %v486 = vunpack.c.l.b16 %v195
    %v487 = vunpack.c.l.b16 %v196
    %v488 = vunpack.c.l.b16 %v197
    %v489 = vunpack.c.l.b16 %v198
    %v490 = vunpack.c.l.b16 %v199
    %v491 = vunpack.c.l.b16 %v200
    %v492 = vunpack.c.l.b16 %v201
    %v493 = vunpack.c.l.b16 %v202
    %v494 = vunpack.c.l.b16 %v203
    %v495 = vunpack.c.l.b16 %v204
    %v496 = vunpack.c.l.b16 %v205
    %v497 = vunpack.c.l.b16 %v206
    %v498 = vunpack.c.l.b16 %v207
    %v499 = vunpack.c.l.b16 %v208
    %v500 = vunpack.c.l.b16 %v209
    %v501 = vunpack.c.l.b16 %v210
    %v502 = vunpack.c.l.b16 %v211
    %v503 = vunpack.c.l.b16 %v212
    %v504 = vunpack.c.l.b16 %v213
    %v505 = vunpack.c.l.b16 %v214
    %v506 = vunpack.c.l.b16 %v215
    %v507 = vunpack.c.l.b16 %v216
    %v508 = vunpack.c.l.b16 %v217
    %v509 = vunpack.c.l.b16 %v218
    %v510 = vunpack.c.l.b16 %v219
    %v511 = vunpack.c.l.b16 %v220
    %v512 = vunpack.c.l.b16 %v221
    %v513 = vunpack.c.l.b16 %v222
    %v514 = vunpack.c.l.b16 %v223
    %v515 = vunpack.c.l.b16 %v224
    %v516 = vunpack.c.l.b16 %v225
    %v517 = vunpack.c.l.b16 %v226
    %v518 = vunpack.c.l.b16 %v227
    %v519 = vunpack.c.l.b16 %v228
    %v520 = vunpack.c.l.b16 %v229
    %v521 = vunpack.c.l.b16 %v230
    %v522 = vunpack.c.l.b16 %v231
    %v523 = vunpack.c.l.b16 %v232
    %v524 = vunpack.c.l.b16 %v233
    %v525 = vunpack.c.l.b16 %v234
    %v526 = vunpack.c.l.b16 %v235
    %v527 = vunpack.c.l.b16 %v236
    %v528 = vunpack.c.l.b16 %v237
    %v529 = vunpack.c.l.b16 %v238
    %v530 = vunpack.c.l.b16 %v239
    %v531 = vunpack.c.l.b16 %v240
    %v532 = vunpack.c.l.b16 %v241
    %v533 = vunpack.c.l.b16 %v242
    %v534 = vunpack.c.l.b16 %v243
    %v535 = vunpack.c.l.b16 %v244
    %v536 = vunpack.c.l.b16 %v245
    %v537 = vpack.c.b16 %v410, %v409
    %v538 = vpack.c.b16 %v412, %v411
    %v539 = vpack.c.b16 %v414, %v413
    %v540 = vpack.c.b16 %v416, %v415
    %v541 = vpack.c.b16 %v418, %v417
    %v542 = vpack.c.b16 %v420, %v419
    %v543 = vpack.c.b16 %v422, %v421
    %v544 = vpack.c.b16 %v424, %v423
    %v545 = vpack.c.b16 %v426, %v425
    %v546 = vpack.c.b16 %v428, %v427
    %v547 = vpack.c.b16 %v430, %v429
    %v548 = vpack.c.b16 %v432, %v431
    %v549 = vpack.c.b16 %v434, %v433
    %v550 = vpack.c.b16 %v436, %v435
    %v551 = vpack.c.b16 %v438, %v437
    %v552 = vpack.c.b16 %v440, %v439
    %v553 = vpack.c.b16 %v442, %v441
    %v554 = vpack.c.b16 %v444, %v443
    %v555 = vpack.c.b16 %v446, %v445
    %v556 = vpack.c.b16 %v448, %v447
    %v557 = vpack.c.b16 %v450, %v449
    %v558 = vpack.c.b16 %v452, %v451
    %v559 = vpack.c.b16 %v454, %v453
    %v560 = vpack.c.b16 %v456, %v455
    %v561 = vpack.c.b16 %v458, %v457
    %v562 = vpack.c.b16 %v460, %v459
    %v563 = vpack.c.b16 %v462, %v461
    %v564 = vpack.c.b16 %v464, %v463
    %v565 = vpack.c.b16 %v466, %v465
    %v566 = vpack.c.b16 %v468, %v467
    %v567 = vpack.c.b16 %v470, %v469
    %v568 = vpack.c.b16 %v472, %v471
    %v569 = vpack.c.b16 %v474, %v473
    %v570 = vpack.c.b16 %v476, %v475
    %v571 = vpack.c.b16 %v478, %v477
    %v572 = vpack.c.b16 %v480, %v479
    %v573 = vpack.c.b16 %v482, %v481
    %v574 = vpack.c.b16 %v484, %v483
    %v575 = vpack.c.b16 %v486, %v485
    %v576 = vpack.c.b16 %v488, %v487
    %v577 = vpack.c.b16 %v490, %v489
    %v578 = vpack.c.b16 %v492, %v491
    %v579 = vpack.c.b16 %v494, %v493
    %v580 = vpack.c.b16 %v496, %v495
    %v581 = vpack.c.b16 %v498, %v497
    %v582 = vpack.c.b16 %v500, %v499
    %v583 = vpack.c.b16 %v502, %v501
    %v584 = vpack.c.b16 %v504, %v503
    %v585 = vpack.c.b16 %v506, %v505
    %v586 = vpack.c.b16 %v508, %v507
    %v587 = vpack.c.b16 %v510, %v509
    %v588 = vpack.c.b16 %v512, %v511
    %v589 = vpack.c.b16 %v514, %v513
    %v590 = vpack.c.b16 %v516, %v515
    %v591 = vpack.c.b16 %v518, %v517
    %v592 = vpack.c.b16 %v520, %v519
    %v593 = vpack.c.b16 %v522, %v521
    %v594 = vpack.c.b16 %v524, %v523
    %v595 = vpack.c.b16 %v526, %v525
    %v596 = vpack.c.b16 %v528, %v527
    %v597 = vpack.c.b16 %v530, %v529
    %v598 = vpack.c.b16 %v532, %v531
    %v599 = vpack.c.b16 %v534, %v533
    %v600 = vpack.c.b16 %v536, %v535
    %665 = vmatprep.subr.bf16.mxu0 0
    %666 = vmatpush1.bf16.msra.mxu0 %v537
    %667 = vmatprep.subr.bf16.mxu0 0
    %668 = vmatpush1.bf16.msra.mxu0 %v538
    %669 = vmatprep.subr.bf16.mxu0 0
    %670 = vmatpush1.bf16.msra.mxu0 %v539
    %671 = vmatprep.subr.bf16.mxu0 0
    %672 = vmatpush1.bf16.msra.mxu0 %v540
    %673 = vmatprep.subr.bf16.mxu0 0
    %674 = vmatpush1.bf16.msra.mxu0 %v541
    %675 = vmatprep.subr.bf16.mxu0 0
    %676 = vmatpush1.bf16.msra.mxu0 %v542
    %677 = vmatprep.subr.bf16.mxu0 0
    %678 = vmatpush1.bf16.msra.mxu0 %v543
    %679 = vmatprep.subr.bf16.mxu0 0
    %680 = vmatpush1.bf16.msra.mxu0 %v544
    %681 = vmatprep.subr.bf16.mxu0 0
    %682 = vmatpush1.bf16.msra.mxu0 %v545
    %683 = vmatprep.subr.bf16.mxu0 0
    %684 = vmatpush1.bf16.msra.mxu0 %v546
    %685 = vmatprep.subr.bf16.mxu0 0
    %686 = vmatpush1.bf16.msra.mxu0 %v547
    %687 = vmatprep.subr.bf16.mxu0 0
    %688 = vmatpush1.bf16.msra.mxu0 %v548
    %689 = vmatprep.subr.bf16.mxu0 0
    %690 = vmatpush1.bf16.msra.mxu0 %v549
    %691 = vmatprep.subr.bf16.mxu0 0
    %692 = vmatpush1.bf16.msra.mxu0 %v550
    %693 = vmatprep.subr.bf16.mxu0 0
    %694 = vmatpush1.bf16.msra.mxu0 %v551
    %695 = vmatprep.subr.bf16.mxu0 0
    %696 = vmatpush1.bf16.msra.mxu0 %v552
    %697 = vmatprep.mubr.bf16.mxu0 %v266
    %698 = vmatmul.mubr.bf16.gmra.mrb[0].mxu0 %v265
    %v699 = vpop.f32.mrb[0].mxu0
    %v700 = vadd.f32 %v251, %v699
    %v701 = vpop.f32.mrb[0].mxu0
    %v702 = vpop.f32.mrb[0].mxu0
    %v703 = vpop.f32.mrb[0].mxu0
    %704 = vdwg.mxu0
    %705 = vmatprep.subr.bf16.mxu0 0
    %706 = vmatpush1.bf16.msra.mxu0 %v553
    %707 = vmatprep.subr.bf16.mxu0 0
    %708 = vmatpush1.bf16.msra.mxu0 %v554
    %709 = vmatprep.subr.bf16.mxu0 0
    %710 = vmatpush1.bf16.msra.mxu0 %v555
    %711 = vmatprep.subr.bf16.mxu0 0
    %712 = vmatpush1.bf16.msra.mxu0 %v556
    %713 = vmatprep.subr.bf16.mxu0 0
    %714 = vmatpush1.bf16.msra.mxu0 %v557
    %715 = vmatprep.subr.bf16.mxu0 0
    %716 = vmatpush1.bf16.msra.mxu0 %v558
    %717 = vmatprep.subr.bf16.mxu0 0
    %718 = vmatpush1.bf16.msra.mxu0 %v559
    %719 = vmatprep.subr.bf16.mxu0 0
    %720 = vmatpush1.bf16.msra.mxu0 %v560
    %721 = vmatprep.subr.bf16.mxu0 0
    %722 = vmatpush1.bf16.msra.mxu0 %v561
    %723 = vmatprep.subr.bf16.mxu0 0
    %724 = vmatpush1.bf16.msra.mxu0 %v562
    %725 = vmatprep.subr.bf16.mxu0 0
    %726 = vmatpush1.bf16.msra.mxu0 %v563
    %727 = vmatprep.subr.bf16.mxu0 0
    %728 = vmatpush1.bf16.msra.mxu0 %v564
    %729 = vmatprep.subr.bf16.mxu0 0
    %730 = vmatpush1.bf16.msra.mxu0 %v565
    %731 = vmatprep.subr.bf16.mxu0 0
    %732 = vmatpush1.bf16.msra.mxu0 %v566
    %733 = vmatprep.subr.bf16.mxu0 0
    %734 = vmatpush1.bf16.msra.mxu0 %v567
    %735 = vmatprep.subr.bf16.mxu0 0
    %736 = vmatpush1.bf16.msra.mxu0 %v568
    %737 = vmatprep.mubr.bf16.mxu0 %v268
    %738 = vmatmul.mubr.bf16.gmra.mrb[0].mxu0 %v267
    %v739 = vpop.f32.mrb[0].mxu0
    %v740 = vadd.f32 %v700, %v739
    %v741 = vpop.f32.mrb[0].mxu0
    %v742 = vpop.f32.mrb[0].mxu0
    %v743 = vpop.f32.mrb[0].mxu0
    %744 = vdwg.mxu0
    %745 = vmatprep.subr.bf16.mxu0 0
    %746 = vmatpush1.bf16.msra.mxu0 %v569
    %747 = vmatprep.subr.bf16.mxu0 0
    %748 = vmatpush1.bf16.msra.mxu0 %v570
    %749 = vmatprep.subr.bf16.mxu0 0
    %750 = vmatpush1.bf16.msra.mxu0 %v571
    %751 = vmatprep.subr.bf16.mxu0 0
    %752 = vmatpush1.bf16.msra.mxu0 %v572
    %753 = vmatprep.subr.bf16.mxu0 0
    %754 = vmatpush1.bf16.msra.mxu0 %v573
    %755 = vmatprep.subr.bf16.mxu0 0
    %756 = vmatpush1.bf16.msra.mxu0 %v574
    %757 = vmatprep.subr.bf16.mxu0 0
    %758 = vmatpush1.bf16.msra.mxu0 %v575
    %759 = vmatprep.subr.bf16.mxu0 0
    %760 = vmatpush1.bf16.msra.mxu0 %v576
    %761 = vmatprep.subr.bf16.mxu0 0
    %762 = vmatpush1.bf16.msra.mxu0 %v577
    %763 = vmatprep.subr.bf16.mxu0 0
    %764 = vmatpush1.bf16.msra.mxu0 %v578
    %765 = vmatprep.subr.bf16.mxu0 0
    %766 = vmatpush1.bf16.msra.mxu0 %v579
    %767 = vmatprep.subr.bf16.mxu0 0
    %768 = vmatpush1.bf16.msra.mxu0 %v580
    %769 = vmatprep.subr.bf16.mxu0 0
    %770 = vmatpush1.bf16.msra.mxu0 %v581
    %771 = vmatprep.subr.bf16.mxu0 0
    %772 = vmatpush1.bf16.msra.mxu0 %v582
    %773 = vmatprep.subr.bf16.mxu0 0
    %774 = vmatpush1.bf16.msra.mxu0 %v583
    %775 = vmatprep.subr.bf16.mxu0 0
    %776 = vmatpush1.bf16.msra.mxu0 %v584
    %777 = vmatprep.mubr.bf16.mxu0 %v270
    %778 = vmatmul.mubr.bf16.gmra.mrb[0].mxu0 %v269
    %v779 = vpop.f32.mrb[0].mxu0
    %v780 = vadd.f32 %v740, %v779
    %v781 = vpop.f32.mrb[0].mxu0
    %v782 = vpop.f32.mrb[0].mxu0
    %v783 = vpop.f32.mrb[0].mxu0
    %784 = vdwg.mxu0
    %785 = vmatprep.subr.bf16.mxu0 0
    %786 = vmatpush1.bf16.msra.mxu0 %v585
    %787 = vmatprep.subr.bf16.mxu0 0
    %788 = vmatpush1.bf16.msra.mxu0 %v586
    %789 = vmatprep.subr.bf16.mxu0 0
    %790 = vmatpush1.bf16.msra.mxu0 %v587
    %791 = vmatprep.subr.bf16.mxu0 0
    %792 = vmatpush1.bf16.msra.mxu0 %v588
    %793 = vmatprep.subr.bf16.mxu0 0
    %794 = vmatpush1.bf16.msra.mxu0 %v589
    %795 = vmatprep.subr.bf16.mxu0 0
    %796 = vmatpush1.bf16.msra.mxu0 %v590
    %797 = vmatprep.subr.bf16.mxu0 0
    %798 = vmatpush1.bf16.msra.mxu0 %v591
    %799 = vmatprep.subr.bf16.mxu0 0
    %800 = vmatpush1.bf16.msra.mxu0 %v592
    %801 = vmatprep.subr.bf16.mxu0 0
    %802 = vmatpush1.bf16.msra.mxu0 %v593
    %803 = vmatprep.subr.bf16.mxu0 0
    %804 = vmatpush1.bf16.msra.mxu0 %v594
    %805 = vmatprep.subr.bf16.mxu0 0
    %806 = vmatpush1.bf16.msra.mxu0 %v595
    %807 = vmatprep.subr.bf16.mxu0 0
    %808 = vmatpush1.bf16.msra.mxu0 %v596
    %809 = vmatprep.subr.bf16.mxu0 0
    %810 = vmatpush1.bf16.msra.mxu0 %v597
    %811 = vmatprep.subr.bf16.mxu0 0
    %812 = vmatpush1.bf16.msra.mxu0 %v598
    %813 = vmatprep.subr.bf16.mxu0 0
    %814 = vmatpush1.bf16.msra.mxu0 %v599
    %815 = vmatprep.subr.bf16.mxu0 0
    %816 = vmatpush1.bf16.msra.mxu0 %v600
    %817 = vmatprep.mubr.bf16.mxu0 %v272
    %818 = vmatmul.mubr.bf16.gmra.mrb[0].mxu0 %v271
    %v819 = vpop.f32.mrb[0].mxu0
    %v820 = vadd.f32 %v780, %v819
    %v821 = vpop.f32.mrb[0].mxu0
    %v822 = vpop.f32.mrb[0].mxu0
    %v823 = vpop.f32.mrb[0].mxu0
    %824 = vdwg.mxu0
    %v825 = vmul.f32 %v820, %v820
    %v826 = vmul.f32 %v820, %v825
    %v827 = vmul.f32 %v826, 0.044715
    %v828 = vadd.f32 %v820, %v827
    %v829 = vmul.f32 %v828, 0.7978846
    %v830 = vtanh.pop %v829
    %v831 = vadd.f32 %v830, 1.0
    %v832 = vmul.f32 %v831, 0.5
    %v833 = vmul.f32 %v820, %v832
    %v834 = vpack.c.bf16 %v833, %v833
    %v835 = vld [vmem:[#allocation7] sm:$0xf]
    %v836 = vld [vmem:[#allocation7 + $0x4] sm:$0xf]
    %v837 = vld [vmem:[#allocation7 + $0x8] sm:$0xf]
    %v838 = vld [vmem:[#allocation7 + $0xc] sm:$0xf]
    %v839 = vld [vmem:[#allocation7 + $0x10] sm:$0xf]
    %v840 = vld [vmem:[#allocation7 + $0x14] sm:$0xf]
    %v841 = vld [vmem:[#allocation7 + $0x18] sm:$0xf]
    %v842 = vld [vmem:[#allocation7 + $0x1c] sm:$0xf]
    %v843 = vld [vmem:[#allocation7 + $0x20] sm:$0xf]
    %v844 = vld [vmem:[#allocation7 + $0x24] sm:$0xf]
    %v845 = vld [vmem:[#allocation7 + $0x28] sm:$0xf]
    %v846 = vld [vmem:[#allocation7 + $0x2c] sm:$0xf]
    %v847 = vld [vmem:[#allocation7 + $0x30] sm:$0xf]
    %v848 = vld [vmem:[#allocation7 + $0x34] sm:$0xf]
    %v849 = vld [vmem:[#allocation7 + $0x38] sm:$0xf]
    %v850 = vld [vmem:[#allocation7 + $0x3c] sm:$0xf]
    %v851 = vld [vmem:[%s4] sm:$0x1]
    %v853 = vlaneseq
    %v854 = vshrl.u32 %v853, 7
    %v855 = vsub.s32 0, %v854
    %v856 = vrot.slane %v851, %v855
    %v874 = vunpack.c.l.b16 %v835
    %v875 = vunpack.c.l.b16 %v836
    %v876 = vunpack.c.l.b16 %v837
    %v877 = vunpack.c.l.b16 %v838
    %v878 = vunpack.c.l.b16 %v839
    %v879 = vunpack.c.l.b16 %v840
    %v880 = vunpack.c.l.b16 %v841
    %v881 = vunpack.c.l.b16 %v842
    %v882 = vunpack.c.l.b16 %v843
    %v883 = vunpack.c.l.b16 %v844
    %v884 = vunpack.c.l.b16 %v845
    %v885 = vunpack.c.l.b16 %v846
    %v886 = vunpack.c.l.b16 %v847
    %v887 = vunpack.c.l.b16 %v848
    %v888 = vunpack.c.l.b16 %v849
    %v889 = vunpack.c.l.b16 %v850
    %v890 = vpack.c.b16 %v875, %v874
    %v891 = vpack.c.b16 %v877, %v876
    %v892 = vpack.c.b16 %v879, %v878
    %v893 = vpack.c.b16 %v881, %v880
    %v894 = vpack.c.b16 %v883, %v882
    %v895 = vpack.c.b16 %v885, %v884
    %v896 = vpack.c.b16 %v887, %v886
    %v897 = vpack.c.b16 %v889, %v888
    %906 = vmatprep.subr.bf16.mxu0 0
    %907 = vmatpush1.bf16.msra.mxu0 %v890
    %908 = vmatprep.subr.bf16.mxu0 0
    %909 = vmatpush1.bf16.msra.mxu0 %v891
    %910 = vmatprep.subr.bf16.mxu0 0
    %911 = vmatpush1.bf16.msra.mxu0 %v892
    %912 = vmatprep.subr.bf16.mxu0 0
    %913 = vmatpush1.bf16.msra.mxu0 %v893
    %914 = vmatprep.subr.bf16.mxu0 0
    %915 = vmatpush1.bf16.msra.mxu0 %v894
    %916 = vmatprep.subr.bf16.mxu0 0
    %917 = vmatpush1.bf16.msra.mxu0 %v895
    %918 = vmatprep.subr.bf16.mxu0 0
    %919 = vmatpush1.bf16.msra.mxu0 %v896
    %920 = vmatprep.subr.bf16.mxu0 0
    %921 = vmatpush1.bf16.msra.mxu0 %v897
    %922 = vmatprep.subr.bf16.mxu0 0
    %923 = vmatpush1.bf16.msra.mxu0 0
    %924 = vmatprep.subr.bf16.mxu0 0
    %925 = vmatpush1.bf16.msra.mxu0 0
    %926 = vmatprep.subr.bf16.mxu0 0
    %927 = vmatpush1.bf16.msra.mxu0 0
    %928 = vmatprep.subr.bf16.mxu0 0
    %929 = vmatpush1.bf16.msra.mxu0 0
    %930 = vmatprep.subr.bf16.mxu0 0
    %931 = vmatpush1.bf16.msra.mxu0 0
    %932 = vmatprep.subr.bf16.mxu0 0
    %933 = vmatpush1.bf16.msra.mxu0 0
    %934 = vmatprep.subr.bf16.mxu0 0
    %935 = vmatpush1.bf16.msra.mxu0 0
    %936 = vmatprep.subr.bf16.mxu0 0
    %937 = vmatpush1.bf16.msra.mxu0 0
    %938 = vmatprep.mubr.bf16.mxu0 0
    %939 = vmatmul.mubr.bf16.gmra.mrb[0].mxu0 %v834
    %v940 = vpop.f32.mrb[0].mxu0
    %v941 = vadd.f32 %v856, %v940
    %v942 = vpop.f32.mrb[0].mxu0
    %v943 = vpop.f32.mrb[0].mxu0
    %v944 = vpop.f32.mrb[0].mxu0
    %945 = vdwg.mxu0
    %v946 = vmul.f32 %v941, %v941
    %v947 = vmul.f32 %v941, %v946
    %v948 = vmul.f32 %v947, 0.044715
    %v949 = vadd.f32 %v941, %v948
    %v950 = vmul.f32 %v949, 0.7978846
    %v951 = vtanh.pop %v950
    %v952 = vadd.f32 %v951, 1.0
    %v953 = vmul.f32 %v952, 0.5
    %v954 = vmul.f32 %v941, %v953
    %v955 = vpack.c.bf16 %v954, %v954
    %v956 = vld [vmem:[#allocation8] sm:$0xf]
    %v957 = vld [vmem:[#allocation8 + $0x4] sm:$0xf]
    %v958 = vld [vmem:[#allocation8 + $0x8] sm:$0xf]
    %v959 = vld [vmem:[#allocation8 + $0xc] sm:$0xf]
    %v960 = vld [vmem:[#allocation8 + $0x10] sm:$0xf]
    %v961 = vld [vmem:[#allocation8 + $0x14] sm:$0xf]
    %v962 = vld [vmem:[#allocation8 + $0x18] sm:$0xf]
    %v963 = vld [vmem:[#allocation8 + $0x1c] sm:$0xf]
    %v964 = vld [vmem:[#allocation8 + $0x20] sm:$0xf]
    %v965 = vld [vmem:[#allocation8 + $0x24] sm:$0xf]
    %v966 = vld [vmem:[#allocation8 + $0x28] sm:$0xf]
    %v967 = vld [vmem:[#allocation8 + $0x2c] sm:$0xf]
    %v968 = vld [vmem:[#allocation8 + $0x30] sm:$0xf]
    %v969 = vld [vmem:[#allocation8 + $0x34] sm:$0xf]
    %v970 = vld [vmem:[#allocation8 + $0x38] sm:$0xf]
    %v971 = vld [vmem:[#allocation8 + $0x3c] sm:$0xf]
    %v972 = vld [vmem:[%s6] sm:$0x1]
    %v974 = vlaneseq
    %v975 = vshrl.u32 %v974, 7
    %v976 = vsub.s32 0, %v975
    %v977 = vrot.slane %v972, %v976
    %v995 = vunpack.c.l.b16 %v956
    %v996 = vunpack.c.l.b16 %v957
    %v997 = vunpack.c.l.b16 %v958
    %v998 = vunpack.c.l.b16 %v959
    %v999 = vunpack.c.l.b16 %v960
    %v1000 = vunpack.c.l.b16 %v961
    %v1001 = vunpack.c.l.b16 %v962
    %v1002 = vunpack.c.l.b16 %v963
    %v1003 = vunpack.c.l.b16 %v964
    %v1004 = vunpack.c.l.b16 %v965
    %v1005 = vunpack.c.l.b16 %v966
    %v1006 = vunpack.c.l.b16 %v967
    %v1007 = vunpack.c.l.b16 %v968
    %v1008 = vunpack.c.l.b16 %v969
    %v1009 = vunpack.c.l.b16 %v970
    %v1010 = vunpack.c.l.b16 %v971
    %v1011 = vpack.c.b16 %v996, %v995
    %v1012 = vpack.c.b16 %v998, %v997
    %v1013 = vpack.c.b16 %v1000, %v999
    %v1014 = vpack.c.b16 %v1002, %v1001
    %v1015 = vpack.c.b16 %v1004, %v1003
    %v1016 = vpack.c.b16 %v1006, %v1005
    %v1017 = vpack.c.b16 %v1008, %v1007
    %v1018 = vpack.c.b16 %v1010, %v1009
    %1027 = vmatprep.subr.bf16.mxu0 0
    %1028 = vmatpush1.bf16.msra.mxu0 %v1011
    %1029 = vmatprep.subr.bf16.mxu0 0
    %1030 = vmatpush1.bf16.msra.mxu0 %v1012
    %1031 = vmatprep.subr.bf16.mxu0 0
    %1032 = vmatpush1.bf16.msra.mxu0 %v1013
    %1033 = vmatprep.subr.bf16.mxu0 0
    %1034 = vmatpush1.bf16.msra.mxu0 %v1014
    %1035 = vmatprep.subr.bf16.mxu0 0
    %1036 = vmatpush1.bf16.msra.mxu0 %v1015
    %1037 = vmatprep.subr.bf16.mxu0 0
    %1038 = vmatpush1.bf16.msra.mxu0 %v1016
    %1039 = vmatprep.subr.bf16.mxu0 0
    %1040 = vmatpush1.bf16.msra.mxu0 %v1017
    %1041 = vmatprep.subr.bf16.mxu0 0
    %1042 = vmatpush1.bf16.msra.mxu0 %v1018
    %1043 = vmatprep.subr.bf16.mxu0 0
    %1044 = vmatpush1.bf16.msra.mxu0 0
    %1045 = vmatprep.subr.bf16.mxu0 0
    %1046 = vmatpush1.bf16.msra.mxu0 0
    %1047 = vmatprep.subr.bf16.mxu0 0
    %1048 = vmatpush1.bf16.msra.mxu0 0
    %1049 = vmatprep.subr.bf16.mxu0 0
    %1050 = vmatpush1.bf16.msra.mxu0 0
    %1051 = vmatprep.subr.bf16.mxu0 0
    %1052 = vmatpush1.bf16.msra.mxu0 0
    %1053 = vmatprep.subr.bf16.mxu0 0
    %1054 = vmatpush1.bf16.msra.mxu0 0
    %1055 = vmatprep.subr.bf16.mxu0 0
    %1056 = vmatpush1.bf16.msra.mxu0 0
    %1057 = vmatprep.subr.bf16.mxu0 0
    %1058 = vmatpush1.bf16.msra.mxu0 0
    %1059 = vmatprep.mubr.bf16.mxu0 0
    %1060 = vmatmul.mubr.bf16.gmra.mrb[0].mxu0 %v955
    %v1061 = vpop.f32.mrb[0].mxu0
    %v1062 = vadd.f32 %v977, %v1061
    %v1063 = vpop.f32.mrb[0].mxu0
    %v1064 = vpop.f32.mrb[0].mxu0
    %v1065 = vpop.f32.mrb[0].mxu0
    %1066 = vdwg.mxu0
    %v1067 = vmul.f32 %v1062, %v1062
    %v1068 = vmul.f32 %v1062, %v1067
    %v1069 = vmul.f32 %v1068, 0.044715
    %v1070 = vadd.f32 %v1062, %v1069
    %v1071 = vmul.f32 %v1070, 0.7978846
    %v1072 = vtanh.pop %v1071
    %v1073 = vadd.f32 %v1072, 1.0
    %v1074 = vmul.f32 %v1073, 0.5
    %v1075 = vmul.f32 %v1062, %v1074
    %v1076 = vpack.c.bf16 %v1075, %v1075
    %v1077 = vld [vmem:[#allocation10] sm:$0xf]
    %v1078 = vld [vmem:[#allocation10 + $0x4] sm:$0xf]
    %v1079 = vld [vmem:[#allocation10 + $0x8] sm:$0xf]
    %v1080 = vld [vmem:[#allocation10 + $0xc] sm:$0xf]
    %v1081 = vld [vmem:[#allocation10 + $0x10] sm:$0xf]
    %v1082 = vld [vmem:[#allocation10 + $0x14] sm:$0xf]
    %v1083 = vld [vmem:[#allocation10 + $0x18] sm:$0xf]
    %v1084 = vld [vmem:[#allocation10 + $0x1c] sm:$0xf]
    %v1085 = vld [vmem:[#allocation10 + $0x20] sm:$0xf]
    %v1086 = vld [vmem:[#allocation10 + $0x24] sm:$0xf]
    %v1087 = vld [vmem:[#allocation10 + $0x28] sm:$0xf]
    %v1088 = vld [vmem:[#allocation10 + $0x2c] sm:$0xf]
    %v1089 = vld [vmem:[#allocation10 + $0x30] sm:$0xf]
    %v1090 = vld [vmem:[#allocation10 + $0x34] sm:$0xf]
    %v1091 = vld [vmem:[#allocation10 + $0x38] sm:$0xf]
    %v1092 = vld [vmem:[#allocation10 + $0x3c] sm:$0xf]
    %v1093 = vld [vmem:[#allocation11] sm:$0xf]
    %v1094 = vld [vmem:[#allocation11 + $0x4] sm:$0xf]
    %v1095 = vld [vmem:[#allocation11 + $0x8] sm:$0xf]
    %v1096 = vld [vmem:[#allocation11 + $0xc] sm:$0xf]
    %v1097 = vld [vmem:[#allocation11 + $0x10] sm:$0xf]
    %v1098 = vld [vmem:[#allocation11 + $0x14] sm:$0xf]
    %v1099 = vld [vmem:[#allocation11 + $0x18] sm:$0xf]
    %v1100 = vld [vmem:[#allocation11 + $0x1c] sm:$0xf]
    %v1101 = vld [vmem:[#allocation11 + $0x20] sm:$0xf]
    %v1102 = vld [vmem:[#allocation11 + $0x24] sm:$0xf]
    %v1103 = vld [vmem:[#allocation11 + $0x28] sm:$0xf]
    %v1104 = vld [vmem:[#allocation11 + $0x2c] sm:$0xf]
    %v1105 = vld [vmem:[#allocation11 + $0x30] sm:$0xf]
    %v1106 = vld [vmem:[#allocation11 + $0x34] sm:$0xf]
    %v1107 = vld [vmem:[#allocation11 + $0x38] sm:$0xf]
    %v1108 = vld [vmem:[#allocation11 + $0x3c] sm:$0xf]
    %v1125 = vunpack.c.l.b16 %v1093
    %v1126 = vunpack.c.l.b16 %v1094
    %v1127 = vunpack.c.l.b16 %v1095
    %v1128 = vunpack.c.l.b16 %v1096
    %v1129 = vunpack.c.l.b16 %v1097
    %v1130 = vunpack.c.l.b16 %v1098
    %v1131 = vunpack.c.l.b16 %v1099
    %v1132 = vunpack.c.l.b16 %v1100
    %v1133 = vunpack.c.l.b16 %v1101
    %v1134 = vunpack.c.l.b16 %v1102
    %v1135 = vunpack.c.l.b16 %v1103
    %v1136 = vunpack.c.l.b16 %v1104
    %v1137 = vunpack.c.l.b16 %v1105
    %v1138 = vunpack.c.l.b16 %v1106
    %v1139 = vunpack.c.l.b16 %v1107
    %v1140 = vunpack.c.l.b16 %v1108
    %v1141 = vpack.c.b16 %v1126, %v1125
    %v1142 = vpack.c.b16 %v1128, %v1127
    %v1143 = vpack.c.b16 %v1130, %v1129
    %v1144 = vpack.c.b16 %v1132, %v1131
    %v1145 = vpack.c.b16 %v1134, %v1133
    %v1146 = vpack.c.b16 %v1136, %v1135
    %v1147 = vpack.c.b16 %v1138, %v1137
    %v1148 = vpack.c.b16 %v1140, %v1139
    %1157 = vmatprep.subr.bf16.mxu0 0
    %1158 = vmatpush1.bf16.msra.mxu0 %v1141
    %1159 = vmatprep.subr.bf16.mxu0 0
    %1160 = vmatpush1.bf16.msra.mxu0 %v1142
    %1161 = vmatprep.subr.bf16.mxu0 0
    %1162 = vmatpush1.bf16.msra.mxu0 %v1143
    %1163 = vmatprep.subr.bf16.mxu0 0
    %1164 = vmatpush1.bf16.msra.mxu0 %v1144
    %1165 = vmatprep.subr.bf16.mxu0 0
    %1166 = vmatpush1.bf16.msra.mxu0 %v1145
    %1167 = vmatprep.subr.bf16.mxu0 0
    %1168 = vmatpush1.bf16.msra.mxu0 %v1146
    %1169 = vmatprep.subr.bf16.mxu0 0
    %1170 = vmatpush1.bf16.msra.mxu0 %v1147
    %1171 = vmatprep.subr.bf16.mxu0 0
    %1172 = vmatpush1.bf16.msra.mxu0 %v1148
    %1173 = vmatprep.subr.bf16.mxu0 0
    %1174 = vmatpush1.bf16.msra.mxu0 0
    %1175 = vmatprep.subr.bf16.mxu0 0
    %1176 = vmatpush1.bf16.msra.mxu0 0
    %1177 = vmatprep.subr.bf16.mxu0 0
    %1178 = vmatpush1.bf16.msra.mxu0 0
    %1179 = vmatprep.subr.bf16.mxu0 0
    %1180 = vmatpush1.bf16.msra.mxu0 0
    %1181 = vmatprep.subr.bf16.mxu0 0
    %1182 = vmatpush1.bf16.msra.mxu0 0
    %1183 = vmatprep.subr.bf16.mxu0 0
    %1184 = vmatpush1.bf16.msra.mxu0 0
    %1185 = vmatprep.subr.bf16.mxu0 0
    %1186 = vmatpush1.bf16.msra.mxu0 0
    %1187 = vmatprep.subr.bf16.mxu0 0
    %1188 = vmatpush1.bf16.msra.mxu0 0
    %1189 = vmatprep.mubr.bf16.mxu0 0
    %1190 = vmatmul.mubr.bf16.gmra.mrb[0].mxu0 %v1076
    %v1191 = vpop.f32.mrb[0].mxu0
    %v1192 = vadd.f32 0.0, %v1191
    %v1193 = vpop.f32.mrb[0].mxu0
    %v1194 = vpop.f32.mrb[0].mxu0
    %v1195 = vpop.f32.mrb[0].mxu0
    %1196 = vdwg.mxu0
    %v1213 = vunpack.c.l.b16 %v1077
    %v1214 = vunpack.c.l.b16 %v1078
    %v1215 = vunpack.c.l.b16 %v1079
    %v1216 = vunpack.c.l.b16 %v1080
    %v1217 = vunpack.c.l.b16 %v1081
    %v1218 = vunpack.c.l.b16 %v1082
    %v1219 = vunpack.c.l.b16 %v1083
    %v1220 = vunpack.c.l.b16 %v1084
    %v1221 = vunpack.c.l.b16 %v1085
    %v1222 = vunpack.c.l.b16 %v1086
    %v1223 = vunpack.c.l.b16 %v1087
    %v1224 = vunpack.c.l.b16 %v1088
    %v1225 = vunpack.c.l.b16 %v1089
    %v1226 = vunpack.c.l.b16 %v1090
    %v1227 = vunpack.c.l.b16 %v1091
    %v1228 = vunpack.c.l.b16 %v1092
    %v1229 = vpack.c.b16 %v1214, %v1213
    %v1230 = vpack.c.b16 %v1216, %v1215
    %v1231 = vpack.c.b16 %v1218, %v1217
    %v1232 = vpack.c.b16 %v1220, %v1219
    %v1233 = vpack.c.b16 %v1222, %v1221
    %v1234 = vpack.c.b16 %v1224, %v1223
    %v1235 = vpack.c.b16 %v1226, %v1225
    %v1236 = vpack.c.b16 %v1228, %v1227
    %1245 = vmatprep.subr.bf16.mxu0 0
    %1246 = vmatpush1.bf16.msra.mxu0 %v1229
    %1247 = vmatprep.subr.bf16.mxu0 0
    %1248 = vmatpush1.bf16.msra.mxu0 %v1230
    %1249 = vmatprep.subr.bf16.mxu0 0
    %1250 = vmatpush1.bf16.msra.mxu0 %v1231
    %1251 = vmatprep.subr.bf16.mxu0 0
    %1252 = vmatpush1.bf16.msra.mxu0 %v1232
    %1253 = vmatprep.subr.bf16.mxu0 0
    %1254 = vmatpush1.bf16.msra.mxu0 %v1233
    %1255 = vmatprep.subr.bf16.mxu0 0
    %1256 = vmatpush1.bf16.msra.mxu0 %v1234
    %1257 = vmatprep.subr.bf16.mxu0 0
    %1258 = vmatpush1.bf16.msra.mxu0 %v1235
    %1259 = vmatprep.subr.bf16.mxu0 0
    %1260 = vmatpush1.bf16.msra.mxu0 %v1236
    %1261 = vmatprep.subr.bf16.mxu0 0
    %1262 = vmatpush1.bf16.msra.mxu0 0
    %1263 = vmatprep.subr.bf16.mxu0 0
    %1264 = vmatpush1.bf16.msra.mxu0 0
    %1265 = vmatprep.subr.bf16.mxu0 0
    %1266 = vmatpush1.bf16.msra.mxu0 0
    %1267 = vmatprep.subr.bf16.mxu0 0
    %1268 = vmatpush1.bf16.msra.mxu0 0
    %1269 = vmatprep.subr.bf16.mxu0 0
    %1270 = vmatpush1.bf16.msra.mxu0 0
    %1271 = vmatprep.subr.bf16.mxu0 0
    %1272 = vmatpush1.bf16.msra.mxu0 0
    %1273 = vmatprep.subr.bf16.mxu0 0
    %1274 = vmatpush1.bf16.msra.mxu0 0
    %1275 = vmatprep.subr.bf16.mxu0 0
    %1276 = vmatpush1.bf16.msra.mxu0 0
    %1277 = vmatprep.mubr.bf16.mxu0 0
    %1278 = vmatmul.mubr.bf16.gmra.mrb[0].mxu0 %v955
    %v1279 = vpop.f32.mrb[0].mxu0
    %v1280 = vadd.f32 %v1192, %v1279
    %v1281 = vpop.f32.mrb[0].mxu0
    %v1282 = vpop.f32.mrb[0].mxu0
    %v1283 = vpop.f32.mrb[0].mxu0
    %1284 = vdwg.mxu0
    %1285 = vst [vmem:[#allocation13] sm:$0xff] %v1280
    // Predicated region
    $region62: #{tpu_custom_call.1} parent=1 // pred_check
      _
    $region63: #{tpu_custom_call.1} parent=1 // pred_check_branch
      %1287 = sbr.rel (0) target = $region65
    $region64: #{tpu_custom_call.1} parent=1 // pred_region
      %s1289 = ssub.s32 128, 128
      %1290 = vsyncadd [#allocation4], %s1289
      %s1292 = sshll.u32 [#allocation13], 4
      %s1293 = int_to_ptr.vmem [resolvable:$true] %s1292
      %1295 = dma.vmem_to_hbm [thread:$0]  %s1293, 128, %s9, [#allocation4]
    $region65: #{tpu_custom_call.1} parent=1 // pred_fallthru
      _
    // Predicated region
    $region66: #{tpu_custom_call.1} parent=1 // pred_check
      _
    $region67: #{tpu_custom_call.1} parent=1 // pred_check_branch
      %1297 = sbr.rel (0) target = $region69
    $region68: #{tpu_custom_call.1} parent=1 // pred_region
      %1298 = dma.done [#allocation4], 128
    $region69: #{tpu_custom_call.1} parent=1 // pred_fallthru
      _
    %1299 = vsyncpa [#allocation3], 1
    %1300 = vsyncpa [#allocation6], 1
    %1301 = vsyncpa [#allocation9], 1
    %1302 = vsyncpa [#allocation12], 1
    %1303 = vsyncpa [#allocation4], 1

</llo_original>
